<compile_context>
chip_gen: v7x
topology: tpu7x:2x2x1
jax: 0.10.0
libtpu: 0.0.40
codegen_flags: <defaults>
</compile_context>

<pallas_src>
import jax
import jax.numpy as jnp
from jax.experimental import pallas as pl
from jax.experimental.pallas import tpu as pltpu


# ---------------------------------------------------------------------------
# Kernel: one hidden tile -> all four gates + state update.
# ---------------------------------------------------------------------------
def _nsnpau_kernel(z_ref, za_ref, wrco_ref, wa_ref, brco_ref, ba_ref, u_ref,
                   h_out_ref, u_out_ref):
    # z_ref    : (B, K)          fused [x | u | h] operand (compute dtype), resident
    # za_ref   : (B, Ka)         fused [x | u] operand (compute dtype), resident
    # wrco_ref : (K, 3*th)       gate-interleaved [r|c|o] weight tile (compute dtype)
    # wa_ref   : (Ka, th)        a-gate weight tile (compute dtype)
    # brco_ref : (1, 3*th)       fused [r|c|o] bias tile (f32)
    # ba_ref   : (1, th)         fused a bias tile (f32)
    # u_ref    : (B, th)         previous u state for this hidden tile (f32)
    pre_rco = jnp.dot(z_ref[...], wrco_ref[...],
                      preferred_element_type=jnp.float32) + brco_ref[...]
    pre_a = jnp.dot(za_ref[...], wa_ref[...],
                    preferred_element_type=jnp.float32) + ba_ref[...]
    th = pre_a.shape[1]
    r_t = jax.nn.sigmoid(pre_rco[:, 0 * th:1 * th])
    c_t = jax.nn.sigmoid(pre_rco[:, 1 * th:2 * th])
    o_t = jax.nn.sigmoid(pre_rco[:, 2 * th:3 * th])
    a = jnp.tanh(pre_a)

    u_prev = u_ref[...]
    u_new = r_t * u_prev - c_t * a
    h_new = o_t * a                      # dropout(p=0.0) is the identity
    u_out_ref[...] = u_new.astype(u_out_ref.dtype)
    h_out_ref[...] = h_new.astype(h_out_ref.dtype)


# ---------------------------------------------------------------------------
# VMEM sizing helpers.
# ---------------------------------------------------------------------------
def _round_up(x, m):
    return ((x + m - 1) // m) * m


def _vmem_budget_bytes():
    """Per-generation VMEM budget with headroom for compiler scratch."""
    try:
        cap = int(pltpu.get_tpu_info().vmem_capacity_bytes)
    except Exception:
        cap = 64 << 20                    # conservative fallback (v7x-sized)
    # v7x (64 MiB): -> 48 MiB.  v5e/v6e (128 MiB): -> ~108 MiB.
    return max(min(cap - (16 << 20), int(cap * 0.85)), 16 << 20)


def _working_set_bytes(bs_pad, k_full, k_a, tile_h, itemsize, wbuf=2):
    f32 = 4
    b = wbuf * tile_h * (3 * k_full + k_a) * itemsize   # weight slabs (pipelined)
    b += 2 * bs_pad * (k_full + k_a) * itemsize         # resident z / z_a operands
    b += wbuf * 4 * tile_h * f32                        # bias tiles
    b += 2 * bs_pad * tile_h * f32                      # u_prev tile
    b += 2 * 2 * bs_pad * tile_h * f32                  # h_t / u_t output tiles
    return b


def _pick_tile_h(h_pad, k_full, k_a, bs_pad, itemsize, budget):
    for t in (1024, 512, 256, 128):
        if h_pad % t != 0:
            continue
        if _working_set_bytes(bs_pad, k_full, k_a, t, itemsize) <= budget:
            return t
    return 128


# ---------------------------------------------------------------------------
# One-time parameter fusion (hoisted out of the per-step path).
# ---------------------------------------------------------------------------
def prepare_fused_params(params, compute_dtype=jnp.float32, tile_h=None,
                         max_batch=16):
    hidden, input_size = params["W_ir"].shape
    h_pad = _round_up(hidden, 128)
    itemsize = jnp.dtype(compute_dtype).itemsize
    k_full = input_size + 2 * h_pad          # z = [x | u | h]
    k_a = input_size + h_pad                 # z_a = [x | u]
    sub = 16 if itemsize < 4 else 8
    bs_pad = _round_up(max(max_batch, 1), sub)

    budget = _vmem_budget_bytes()
    if tile_h is None:
        tile_h = _pick_tile_h(h_pad, k_full, k_a, bs_pad, itemsize, budget)
    assert h_pad % tile_h == 0 and tile_h % 128 == 0
    nt = h_pad // tile_h

    def pad_cols(w):                         # output (hidden) dim H -> h_pad
        return jnp.pad(w, ((0, 0), (0, h_pad - hidden)))

    def pad_rows(w):                         # state (hidden) row dim H -> h_pad
        return jnp.pad(w, ((0, h_pad - hidden), (0, 0)))

    # Per-gate (K, h_pad) column blocks.  Row order matches z = [x | u | h].
    # Transposition mirrors the reference: x/h weights applied transposed,
    # W_ur/W_uc/W_uo untransposed, W_ua transposed.
    def gate_block(w_i_t, w_u, w_h_t=None):
        blocks = [pad_cols(w_i_t), pad_rows(pad_cols(w_u))]
        if w_h_t is not None:
            blocks.append(pad_rows(pad_cols(w_h_t)))
        return jnp.concatenate(blocks, axis=0)

    gate_r = gate_block(params["W_ir"].T, params["W_ur"], params["W_hr"].T)
    gate_c = gate_block(params["W_ic"].T, params["W_uc"], params["W_hc"].T)
    gate_o = gate_block(params["W_io"].T, params["W_uo"], params["W_ho"].T)
    gate_a = gate_block(params["W_ia"].T, params["W_ua"].T)      # no h rows

    # Tile-major, gate-interleaved weight slabs: per grid step the weight DMA
    # is one contiguous (K, 3*tile_h) / (Ka, tile_h) block.
    w_rco = jnp.stack([gate_r, gate_c, gate_o], axis=1)          # (K, 3, h_pad)
    w_rco = (w_rco.reshape(k_full, 3, nt, tile_h)
                  .transpose(2, 0, 1, 3)
                  .reshape(nt, k_full, 3 * tile_h))
    w_a = gate_a.reshape(k_a, nt, tile_h).transpose(1, 0, 2)     # (nt, Ka, th)

    def pad_b(b):
        return jnp.pad(b, (0, h_pad - hidden))

    b_r = pad_b(params["b_ir"] + params["b_hr"] + params["b_ur"])
    b_c = pad_b(params["b_ic"] + params["b_hc"] + params["b_uc"])
    b_o = pad_b(params["b_io"] + params["b_ho"] + params["b_uo"])
    b_a = pad_b(params["b_ia"] + params["b_ua"])
    b_rco = (jnp.stack([b_r, b_c, b_o], axis=0)
                .reshape(3, nt, tile_h).transpose(1, 0, 2)
                .reshape(nt, 1, 3 * tile_h))
    b_a = b_a.reshape(nt, 1, tile_h)

    w_rco = w_rco.astype(compute_dtype)
    w_a = w_a.astype(compute_dtype)

    return {
        "w_rco": w_rco,
        "w_a": w_a,
        # Cold-start (h0 = u0 = 0): only the x rows contribute -> stream just them.
        "w_rco_x": w_rco[:, :input_size, :],
        "w_a_x": w_a[:, :input_size, :],
        "b_rco": b_rco.astype(jnp.float32),
        "b_a": b_a.astype(jnp.float32),
        "input_size": input_size,
        "hidden_size": hidden,
        "hidden_pad": h_pad,
        "tile_h": tile_h,
        "compute_dtype": compute_dtype,
        "vmem_budget": budget,
    }


# ---------------------------------------------------------------------------
# Forward wrapper.
# ---------------------------------------------------------------------------
def nsnpau_cell_forward(x, fused, init_states=None):
    bs, input_size = x.shape
    assert input_size == fused["input_size"]
    hidden = fused["hidden_size"]
    h_pad = fused["hidden_pad"]
    tile_h = fused["tile_h"]
    cdt = fused["compute_dtype"]
    nt = h_pad // tile_h
    itemsize = jnp.dtype(cdt).itemsize
    sub = 16 if itemsize < 4 else 8
    bs_pad = _round_up(bs, sub)              # full (sublane, lane) tiles

    def pad_batch(a):
        return jnp.pad(a, ((0, bs_pad - bs), (0, 0)))

    x_p = pad_batch(x.astype(jnp.float32))

    if init_states is None:
        # h0 = u0 = 0: drop the h/u weight rows entirely (they multiply zeros).
        z = x_p.astype(cdt)
        z_a = z
        w_rco, w_a = fused["w_rco_x"], fused["w_a_x"]
        u0 = jnp.zeros((bs_pad, h_pad), jnp.float32)
    else:
        h0 = jnp.broadcast_to(init_states[0], (bs, hidden)).astype(jnp.float32)
        u0 = jnp.broadcast_to(init_states[1], (bs, hidden)).astype(jnp.float32)
        h0 = pad_batch(jnp.pad(h0, ((0, 0), (0, h_pad - hidden))))
        u0 = pad_batch(jnp.pad(u0, ((0, 0), (0, h_pad - hidden))))
        z_a = jnp.concatenate([x_p, u0], axis=1).astype(cdt)
        z = jnp.concatenate([x_p, u0, h0], axis=1).astype(cdt)
        w_rco, w_a = fused["w_rco"], fused["w_a"]

    k = z.shape[1]
    ka = z_a.shape[1]

    budget = fused["vmem_budget"]
    work = _working_set_bytes(bs_pad, k, ka, tile_h, itemsize)
    vmem_limit = int(min(budget, max(work + (4 << 20), 16 << 20)))

    # Deeper weight pipelining only when tiles are small, there are enough grid
    # steps to benefit, and the third buffer still fits the VMEM budget.
    w_kwargs = {}
    if (tile_h <= 128 and nt >= 4
            and _working_set_bytes(bs_pad, k, ka, tile_h, itemsize, wbuf=3) <= budget):
        w_kwargs["pipeline_mode"] = pl.Buffered(3)

    grid_spec = pltpu.PrefetchScalarGridSpec(
        num_scalar_prefetch=0,
        grid=(nt,),
        in_specs=[
            pl.BlockSpec((bs_pad, k), lambda j: (0, 0)),              # z, resident
            pl.BlockSpec((bs_pad, ka), lambda j: (0, 0)),             # z_a, resident
            pl.BlockSpec((None, k, 3 * tile_h), lambda j: (j, 0, 0),  # contiguous
                         **w_kwargs),                                 # r/c/o slab
            pl.BlockSpec((None, ka, tile_h), lambda j: (j, 0, 0),     # a slab
                         **w_kwargs),
            pl.BlockSpec((None, 1, 3 * tile_h), lambda j: (j, 0, 0)), # r/c/o bias
            pl.BlockSpec((None, 1, tile_h), lambda j: (j, 0, 0)),     # a bias
            pl.BlockSpec((bs_pad, tile_h), lambda j: (0, j)),         # u state tile
        ],
        out_specs=(
            pl.BlockSpec((bs_pad, tile_h), lambda j: (0, j)),         # h_t tile
            pl.BlockSpec((bs_pad, tile_h), lambda j: (0, j)),         # u_t tile
        ),
    )

    h_t, u_t = pl.pallas_call(
        _nsnpau_kernel,
        grid_spec=grid_spec,
        out_shape=(jax.ShapeDtypeStruct((bs_pad, h_pad), jnp.float32),
                   jax.ShapeDtypeStruct((bs_pad, h_pad), jnp.float32)),
        compiler_params=pltpu.CompilerParams(
            dimension_semantics=("parallel",),
            vmem_limit_bytes=vmem_limit),
    )(z, z_a, w_rco, w_a, fused["b_rco"], fused["b_a"], u0)

    return h_t[:bs, :hidden], u_t[:bs, :hidden]


# ---------------------------------------------------------------------------
# Parameter init (matches PyTorch: xavier_uniform for 2-D, zeros for 1-D)
# and a pure-JAX reference mirroring the PyTorch forward.
# ---------------------------------------------------------------------------
def _xavier_uniform(key, shape):
    fan_out, fan_in = shape
    limit = jnp.sqrt(6.0 / (fan_in + fan_out))
    return jax.random.uniform(key, shape, jnp.float32, -limit, limit)


def init_nsnpau_params(key, input_size, hidden_size):
    names2d = [("W_ir", (hidden_size, input_size)),
               ("W_hr", (hidden_size, hidden_size)),
               ("W_ur", (hidden_size, hidden_size)),
               ("W_ic", (hidden_size, input_size)),
               ("W_hc", (hidden_size, hidden_size)),
               ("W_uc", (hidden_size, hidden_size)),
               ("W_io", (hidden_size, input_size)),
               ("W_ho", (hidden_size, hidden_size)),
               ("W_uo", (hidden_size, hidden_size)),
               ("W_ia", (hidden_size, input_size)),
               ("W_ua", (hidden_size, hidden_size))]
    keys = jax.random.split(key, len(names2d))
    params = {name: _xavier_uniform(k, shape)
              for (name, shape), k in zip(names2d, keys)}
    for bname in ["b_ir", "b_hr", "b_ur", "b_ic", "b_hc", "b_uc",
                  "b_io", "b_ho", "b_uo", "b_ia", "b_ua"]:
        params[bname] = jnp.zeros((hidden_size,), jnp.float32)
    return params


def _reference_forward(x, params, init_states=None):
    hidden = params["W_ir"].shape[0]
    if init_states is None:
        h_t = jnp.zeros((hidden,), jnp.float32)
        u_t = jnp.zeros((hidden,), jnp.float32)
    else:
        h_t, u_t = init_states
    r_t = jax.nn.sigmoid(x @ params["W_ir"].T + params["b_ir"]
                         + h_t @ params["W_hr"].T + params["b_hr"]
                         + u_t @ params["W_ur"] + params["b_ur"])
    c_t = jax.nn.sigmoid(x @ params["W_ic"].T + params["b_ic"]
                         + h_t @ params["W_hc"].T + params["b_hc"]
                         + u_t @ params["W_uc"] + params["b_uc"])
    o_t = jax.nn.sigmoid(x @ params["W_io"].T + params["b_io"]
                         + h_t @ params["W_ho"].T + params["b_ho"]
                         + u_t @ params["W_uo"] + params["b_uo"])
    a = jnp.tanh(x @ params["W_ia"].T + params["b_ia"]
                 + u_t @ params["W_ua"].T + params["b_ua"])
    u_new = r_t * u_t - c_t * a
    h_new = o_t * a
    return h_new, u_new


if __name__ == "__main__":
    key = jax.random.PRNGKey(0)
    (k_p1, k_x1, k_h1, k_u1, k_p2, k_x2, k_h2, k_u2,
     k_p3, k_x3, k_h3, k_u3) = jax.random.split(key, 12)

    # --- Test 1: irregular H (padding path), f32, explicit + cold start ----
    batch, input_size, hidden_size = 4, 8, 32
    params = init_nsnpau_params(k_p1, input_size, hidden_size)
    x = jax.random.normal(k_x1, (batch, input_size), jnp.float32)
    h_init = jax.random.normal(k_h1, (batch, hidden_size), jnp.float32)
    u_init = jax.random.normal(k_u1, (batch, hidden_size), jnp.float32)

    fused = prepare_fused_params(params, compute_dtype=jnp.float32)
    h_t, u_t = nsnpau_cell_forward(x, fused, init_states=(h_init, u_init))
    jax.block_until_ready((h_t, u_t))
    h_ref, u_ref = _reference_forward(x, params, init_states=(h_init, u_init))
    assert jnp.allclose(h_t, h_ref, atol=1e-5, rtol=1e-5)
    assert jnp.allclose(u_t, u_ref, atol=1e-5, rtol=1e-5)

    h_t0, u_t0 = nsnpau_cell_forward(x, fused, init_states=None)
    jax.block_until_ready((h_t0, u_t0))
    h_ref0, u_ref0 = _reference_forward(x, params, init_states=None)
    assert jnp.allclose(h_t0, h_ref0, atol=1e-5, rtol=1e-5)
    assert jnp.allclose(u_t0, u_ref0, atol=1e-5, rtol=1e-5)

    # --- Test 2: multi-tile hidden grid + odd batch + bf16 operands --------
    batch2, input2, hidden2 = 3, 16, 256
    params2 = init_nsnpau_params(k_p2, input2, hidden2)
    x2 = jax.random.normal(k_x2, (batch2, input2), jnp.float32)
    h2 = jax.random.normal(k_h2, (batch2, hidden2), jnp.float32)
    u2 = jax.random.normal(k_u2, (batch2, hidden2), jnp.float32)
    fused2 = prepare_fused_params(params2, compute_dtype=jnp.bfloat16, tile_h=128)
    h_t2, u_t2 = nsnpau_cell_forward(x2, fused2, init_states=(h2, u2))
    jax.block_until_ready((h_t2, u_t2))
    h_ref2, u_ref2 = _reference_forward(x2, params2, init_states=(h2, u2))
    assert jnp.allclose(h_t2, h_ref2, atol=5e-2, rtol=5e-2)
    assert jnp.allclose(u_t2, u_ref2, atol=5e-2, rtol=5e-2)

    # --- Test 3: auto tile selection, non-power-of-two tile count (nt=3) ---
    batch3, input3, hidden3 = 2, 8, 384
    params3 = init_nsnpau_params(k_p3, input3, hidden3)
    x3 = jax.random.normal(k_x3, (batch3, input3), jnp.float32)
    h3 = jax.random.normal(k_h3, (batch3, hidden3), jnp.float32)
    u3 = jax.random.normal(k_u3, (batch3, hidden3), jnp.float32)
    fused3 = prepare_fused_params(params3, compute_dtype=jnp.float32)
    h_t3, u_t3 = nsnpau_cell_forward(x3, fused3, init_states=(h3, u3))
    jax.block_until_ready((h_t3, u_t3))
    h_ref3, u_ref3 = _reference_forward(x3, params3, init_states=(h3, u3))
    assert jnp.allclose(h_t3, h_ref3, atol=1e-5, rtol=1e-5)
    assert jnp.allclose(u_t3, u_ref3, atol=1e-5, rtol=1e-5)

    print("KERNEL_OK")
</pallas_src>

<mosaic_0001>
module attributes {stable_mosaic.version = 11 : i64} {
  func.func @_nsnpau_kernel(%arg0: i32, %arg1: memref<8x264xf32, #tpu.memory_space<vmem>>, %arg2: memref<8x136xf32, #tpu.memory_space<vmem>>, %arg3: memref<1x264x384xf32, #tpu.memory_space<vmem>>, %arg4: memref<1x136x128xf32, #tpu.memory_space<vmem>>, %arg5: memref<1x1x384xf32, #tpu.memory_space<vmem>>, %arg6: memref<1x1x128xf32, #tpu.memory_space<vmem>>, %arg7: memref<8x128xf32, #tpu.memory_space<vmem>>, %arg8: memref<8x128xf32, #tpu.memory_space<vmem>>, %arg9: memref<8x128xf32, #tpu.memory_space<vmem>>) attributes {dimension_semantics = [#tpu.dimension_semantics<parallel>], iteration_bounds = array<i64: 1>, scalar_prefetch = 0 : i64, scratch_operands = 0 : i64, tpu.core_type = #tpu.core_type<tc>, window_params = [{pipeline_mode = #tpu.pipeline_mode<synchronous>, transform_indices = @transform_0, window_bounds = array<i64: 8, 264>}, {pipeline_mode = #tpu.pipeline_mode<synchronous>, transform_indices = @transform_1, window_bounds = array<i64: 8, 136>}, {transform_indices = @transform_2, window_bounds = array<i64: 1, 264, 384>}, {transform_indices = @transform_3, window_bounds = array<i64: 1, 136, 128>}, {transform_indices = @transform_4, window_bounds = array<i64: 1, 1, 384>}, {transform_indices = @transform_5, window_bounds = array<i64: 1, 1, 128>}, {transform_indices = @transform_6, window_bounds = array<i64: 8, 128>}, {transform_indices = @transform_7, window_bounds = array<i64: 8, 128>}, {transform_indices = @transform_8, window_bounds = array<i64: 8, 128>}]} {
    %c0 = arith.constant 0 : index
    %c0_0 = arith.constant 0 : index
    %0 = vector.load %arg1[%c0, %c0_0] : memref<8x264xf32, #tpu.memory_space<vmem>>, vector<8x264xf32>
    %c0_1 = arith.constant 0 : index
    %c0_2 = arith.constant 0 : index
    %c0_3 = arith.constant 0 : index
    %1 = vector.load %arg3[%c0_1, %c0_2, %c0_3] : memref<1x264x384xf32, #tpu.memory_space<vmem>>, vector<1x264x384xf32>
    %2 = vector.shape_cast %1 : vector<1x264x384xf32> to vector<264x384xf32>
    %cst = arith.constant dense<0.000000e+00> : vector<8x384xf32>
    %3 = tpu.matmul %0, %2, %cst {dimension_numbers = #tpu.dot_dimension_numbers<[1], [0], [0], [1], [0, 0, 1, 1], [], []>} : vector<8x264xf32>, vector<264x384xf32>, vector<8x384xf32> -> vector<8x384xf32>
    %c0_4 = arith.constant 0 : index
    %c0_5 = arith.constant 0 : index
    %c0_6 = arith.constant 0 : index
    %4 = vector.load %arg5[%c0_4, %c0_5, %c0_6] : memref<1x1x384xf32, #tpu.memory_space<vmem>>, vector<1x1x384xf32>
    %5 = vector.shape_cast %4 : vector<1x1x384xf32> to vector<1x384xf32>
    %6 = vector.broadcast %5 : vector<1x384xf32> to vector<8x384xf32>
    %7 = arith.addf %3, %6 : vector<8x384xf32>
    %c0_7 = arith.constant 0 : index
    %c0_8 = arith.constant 0 : index
    %8 = vector.load %arg2[%c0_7, %c0_8] : memref<8x136xf32, #tpu.memory_space<vmem>>, vector<8x136xf32>
    %c0_9 = arith.constant 0 : index
    %c0_10 = arith.constant 0 : index
    %c0_11 = arith.constant 0 : index
    %9 = vector.load %arg4[%c0_9, %c0_10, %c0_11] : memref<1x136x128xf32, #tpu.memory_space<vmem>>, vector<1x136x128xf32>
    %10 = vector.shape_cast %9 : vector<1x136x128xf32> to vector<136x128xf32>
    %cst_12 = arith.constant dense<0.000000e+00> : vector<8x128xf32>
    %11 = tpu.matmul %8, %10, %cst_12 {dimension_numbers = #tpu.dot_dimension_numbers<[1], [0], [0], [1], [0, 0, 1, 1], [], []>} : vector<8x136xf32>, vector<136x128xf32>, vector<8x128xf32> -> vector<8x128xf32>
    %c0_13 = arith.constant 0 : index
    %c0_14 = arith.constant 0 : index
    %c0_15 = arith.constant 0 : index
    %12 = vector.load %arg6[%c0_13, %c0_14, %c0_15] : memref<1x1x128xf32, #tpu.memory_space<vmem>>, vector<1x1x128xf32>
    %13 = vector.shape_cast %12 : vector<1x1x128xf32> to vector<1x128xf32>
    %14 = vector.broadcast %13 : vector<1x128xf32> to vector<8x128xf32>
    %15 = arith.addf %11, %14 : vector<8x128xf32>
    %16 = vector.extract_strided_slice %7 {offsets = [0, 0], sizes = [8, 128], strides = [1, 1]} : vector<8x384xf32> to vector<8x128xf32>
    %17 = arith.negf %16 : vector<8x128xf32>
    %18 = math.exp %17 : vector<8x128xf32>
    %cst_16 = arith.constant 1.000000e+00 : f32
    %19 = vector.broadcast %cst_16 : f32 to vector<8x128xf32>
    %20 = arith.addf %19, %18 : vector<8x128xf32>
    %21 = arith.divf %19, %20 : vector<8x128xf32>
    %22 = vector.extract_strided_slice %7 {offsets = [0, 128], sizes = [8, 128], strides = [1, 1]} : vector<8x384xf32> to vector<8x128xf32>
    %23 = arith.negf %22 : vector<8x128xf32>
    %24 = math.exp %23 : vector<8x128xf32>
    %cst_17 = arith.constant 1.000000e+00 : f32
    %25 = vector.broadcast %cst_17 : f32 to vector<8x128xf32>
    %26 = arith.addf %25, %24 : vector<8x128xf32>
    %27 = arith.divf %25, %26 : vector<8x128xf32>
    %28 = vector.extract_strided_slice %7 {offsets = [0, 256], sizes = [8, 128], strides = [1, 1]} : vector<8x384xf32> to vector<8x128xf32>
    %29 = arith.negf %28 : vector<8x128xf32>
    %30 = math.exp %29 : vector<8x128xf32>
    %cst_18 = arith.constant 1.000000e+00 : f32
    %31 = vector.broadcast %cst_18 : f32 to vector<8x128xf32>
    %32 = arith.addf %31, %30 : vector<8x128xf32>
    %33 = arith.divf %31, %32 : vector<8x128xf32>
    %34 = math.tanh %15 : vector<8x128xf32>
    %c0_19 = arith.constant 0 : index
    %c0_20 = arith.constant 0 : index
    %35 = vector.load %arg7[%c0_19, %c0_20] : memref<8x128xf32, #tpu.memory_space<vmem>>, vector<8x128xf32>
    %36 = arith.mulf %21, %35 : vector<8x128xf32>
    %37 = arith.mulf %27, %34 : vector<8x128xf32>
    %38 = arith.subf %36, %37 : vector<8x128xf32>
    %39 = arith.mulf %33, %34 : vector<8x128xf32>
    %c0_21 = arith.constant 0 : index
    %c0_22 = arith.constant 0 : index
    %40 = vector.load %arg9[%c0_21, %c0_22] : memref<8x128xf32, #tpu.memory_space<vmem>>, vector<8x128xf32>
    tpu.vector_store %arg9[%c0_21, %c0_22], %38 {strides = array<i32>} : memref<8x128xf32, #tpu.memory_space<vmem>>, vector<8x128xf32>,
    %c0_23 = arith.constant 0 : index
    %c0_24 = arith.constant 0 : index
    %41 = vector.load %arg8[%c0_23, %c0_24] : memref<8x128xf32, #tpu.memory_space<vmem>>, vector<8x128xf32>
    tpu.vector_store %arg8[%c0_23, %c0_24], %39 {strides = array<i32>} : memref<8x128xf32, #tpu.memory_space<vmem>>, vector<8x128xf32>,
    return
  }
  func.func @transform_0(%arg0: i32) -> (i32, i32) {
    %c0_i32 = arith.constant 0 : i32
    %c0_i32_0 = arith.constant 0 : i32
    %c0_i32_1 = arith.constant 0 : i32
    return %c0_i32, %c0_i32_0 : i32, i32
  }
  func.func @transform_1(%arg0: i32) -> (i32, i32) {
    %c0_i32 = arith.constant 0 : i32
    %c0_i32_0 = arith.constant 0 : i32
    %c0_i32_1 = arith.constant 0 : i32
    return %c0_i32, %c0_i32_0 : i32, i32
  }
  func.func @transform_2(%arg0: i32) -> (i32, i32, i32) {
    %c0_i32 = arith.constant 0 : i32
    %c0_i32_0 = arith.constant 0 : i32
    %c0_i32_1 = arith.constant 0 : i32
    return %arg0, %c0_i32, %c0_i32_0 : i32, i32, i32
  }
  func.func @transform_3(%arg0: i32) -> (i32, i32, i32) {
    %c0_i32 = arith.constant 0 : i32
    %c0_i32_0 = arith.constant 0 : i32
    %c0_i32_1 = arith.constant 0 : i32
    return %arg0, %c0_i32, %c0_i32_0 : i32, i32, i32
  }
  func.func @transform_4(%arg0: i32) -> (i32, i32, i32) {
    %c0_i32 = arith.constant 0 : i32
    %c0_i32_0 = arith.constant 0 : i32
    %c0_i32_1 = arith.constant 0 : i32
    return %arg0, %c0_i32, %c0_i32_0 : i32, i32, i32
  }
  func.func @transform_5(%arg0: i32) -> (i32, i32, i32) {
    %c0_i32 = arith.constant 0 : i32
    %c0_i32_0 = arith.constant 0 : i32
    %c0_i32_1 = arith.constant 0 : i32
    return %arg0, %c0_i32, %c0_i32_0 : i32, i32, i32
  }
  func.func @transform_6(%arg0: i32) -> (i32, i32) {
    %c0_i32 = arith.constant 0 : i32
    %c0_i32_0 = arith.constant 0 : i32
    return %c0_i32, %arg0 : i32, i32
  }
  func.func @transform_7(%arg0: i32) -> (i32, i32) {
    %c0_i32 = arith.constant 0 : i32
    %c0_i32_0 = arith.constant 0 : i32
    return %c0_i32, %arg0 : i32, i32
  }
  func.func @transform_8(%arg0: i32) -> (i32, i32) {
    %c0_i32 = arith.constant 0 : i32
    %c0_i32_0 = arith.constant 0 : i32
    return %c0_i32, %arg0 : i32, i32
  }
}

</mosaic_0001>

<llo_original>
// kernel: tpu_custom_call.1
$region0: #{tpu_custom_call.1}
  #allocation0 [shape = 'u32[]', space=smem, size = 0x4, offset = 0x4, fixed_abs, tag = 'smem constant byte address 0x4 - core index']
  #allocation1 [shape = 'u32[144,128]{1,0:T(1,128)}', space=vmem, size = 0x12000, scoped, tag = 'internal scratch']
  %s0 = inlined_call_operand.hbm [shape: f32[8,264], index: 0, kind: input, shape index: {}]
  %s1 = inlined_call_operand.hbm [shape: f32[8,136], index: 1, kind: input, shape index: {}]
  %s2 = inlined_call_operand.hbm [shape: f32[1,264,384], index: 2, kind: input, shape index: {}]
  %s3 = inlined_call_operand.hbm [shape: f32[1,136,128], index: 3, kind: input, shape index: {}]
  %s4 = inlined_call_operand.vmem [shape: f32[1,1,384], index: 4, kind: input, shape index: {}]
  %s5 = inlined_call_operand.vmem [shape: f32[1,1,128], index: 5, kind: input, shape index: {}]
  %s6 = inlined_call_operand.vmem [shape: f32[8,128], index: 6, kind: input, shape index: {}]
  %s7 = inlined_call_operand.hbm [shape: f32[8,128], index: 7, kind: output, shape index: {0}]
  %s8 = inlined_call_operand.hbm [shape: f32[8,128], index: 8, kind: output, shape index: {1}]
  %9 = xla_tuple %s7, %s8
  %s10 = sld [smem:[#allocation0]]
  $region62: #{tpu_custom_call.1} parent=0
    _
  %s12 = ssub.s32 1, %s10
  %s13 = scalar_select 0, %s12, %s10
  $region1: #{tpu_custom_call.1} parent=0
    #allocation2 [shape = 'u8[12288]{0}', space=vmem, size = 0x3000, scoped, tag = 'input window, operand 0, single buffered']
    #allocation3 [shape = 's32[1]{0}', space=sflag, size = 0x4, scoped, tag = 'scoped memory for tpu_custom_call.1']
    #allocation4 [shape = 's32[1]{0}', space=sflag, size = 0x4, scoped, tag = 'scoped memory for tpu_custom_call.1']
    #allocation5 [shape = 'u8[8192]{0}', space=vmem, size = 0x2000, scoped, tag = 'input window, operand 1, single buffered']
    #allocation6 [shape = 's32[1]{0}', space=sflag, size = 0x4, scoped, tag = 'scoped memory for tpu_custom_call.1']
    #allocation7 [shape = 'u8[405504]{0}', space=vmem, size = 0x63000, scoped, tag = 'input window, operand 2, single buffered']
    #allocation8 [shape = 'u8[69632]{0}', space=vmem, size = 0x11000, scoped, tag = 'input window, operand 3, single buffered']
    #allocation9 [shape = 's32[1]{0}', space=sflag, size = 0x4, scoped, tag = 'scoped memory for tpu_custom_call.1']
    #allocation10 [shape = 'u8[4096]{0}', space=vmem, size = 0x1000, scoped, tag = 'output window, operand 0, single buffered']
    #allocation11 [shape = 'u8[4096]{0}', space=vmem, size = 0x1000, scoped, tag = 'output window, operand 1, single buffered']
    #allocation12 [shape = 's32[1]{0}', space=sflag, size = 0x4, scoped, tag = 'scoped memory for tpu_custom_call.1']
    %14 = vsyncpa [#allocation3], 0
    %15 = vsyncpa [#allocation6], 0
    %16 = vsyncpa [#allocation9], 0
    %17 = vsyncpa [#allocation4], 0
    %18 = vsyncpa [#allocation12], 0
    // Predicated region
    $region2: #{tpu_custom_call.1} parent=1 // pred_check
      _
    $region3: #{tpu_custom_call.1} parent=1 // pred_check_branch
      %20 = sbr.rel (0) target = $region5
    $region4: #{tpu_custom_call.1} parent=1 // pred_region
      %s22 = ssub.s32 384, 384
      %23 = vsyncadd [#allocation3], %s22
      %s25 = sshll.u32 [#allocation2], 4
      %s26 = int_to_ptr.vmem [resolvable:$true] %s25
      %28 = dma.hbm_to_vmem [thread:$0]  %s0, 384, %s26, [#allocation3]
    $region5: #{tpu_custom_call.1} parent=1 // pred_fallthru
      _
    // Predicated region
    $region6: #{tpu_custom_call.1} parent=1 // pred_check
      _
    $region7: #{tpu_custom_call.1} parent=1 // pred_check_branch
      %30 = sbr.rel (0) target = $region9
    $region8: #{tpu_custom_call.1} parent=1 // pred_region
      %s32 = ssub.s32 256, 256
      %33 = vsyncadd [#allocation6], %s32
      %s35 = sshll.u32 [#allocation5], 4
      %s36 = int_to_ptr.vmem [resolvable:$true] %s35
      %38 = dma.hbm_to_vmem [thread:$0]  %s1, 256, %s36, [#allocation6]
    $region9: #{tpu_custom_call.1} parent=1 // pred_fallthru
      _
    // Predicated region
    $region10: #{tpu_custom_call.1} parent=1 // pred_check
      _
    $region11: #{tpu_custom_call.1} parent=1 // pred_check_branch
      %40 = sbr.rel (0) target = $region13
    $region12: #{tpu_custom_call.1} parent=1 // pred_region
      %s42 = ssub.s32 12672, 12672
      %43 = vsyncadd [#allocation6], %s42
      %s44 = sshll.u32 [#allocation7], 4
      %s45 = int_to_ptr.vmem [resolvable:$true] %s44
      %50 = dma.hbm_to_vmem [thread:$0]  %s2, 12672, %s45, [#allocation6], 384, 384, 24
    $region13: #{tpu_custom_call.1} parent=1 // pred_fallthru
      _
    // Predicated region
    $region14: #{tpu_custom_call.1} parent=1 // pred_check
      _
    $region15: #{tpu_custom_call.1} parent=1 // pred_check_branch
      %52 = sbr.rel (0) target = $region17
    $region16: #{tpu_custom_call.1} parent=1 // pred_region
      %s54 = ssub.s32 2176, 2176
      %55 = vsyncadd [#allocation9], %s54
      %s56 = sshll.u32 [#allocation8], 4
      %s57 = int_to_ptr.vmem [resolvable:$true] %s56
      %62 = dma.hbm_to_vmem [thread:$0]  %s3, 2176, %s57, [#allocation9], 128, 128, 8
    $region17: #{tpu_custom_call.1} parent=1 // pred_fallthru
      _
    // Predicated region
    $region18: #{tpu_custom_call.1} parent=1 // pred_check
      _
    $region19: #{tpu_custom_call.1} parent=1 // pred_check_branch
      %64 = sbr.rel (0) target = $region21
    $region20: #{tpu_custom_call.1} parent=1 // pred_region
      _
    $region21: #{tpu_custom_call.1} parent=1 // pred_fallthru
      _
    // Predicated region
    $region22: #{tpu_custom_call.1} parent=1 // pred_check
      _
    $region23: #{tpu_custom_call.1} parent=1 // pred_check_branch
      %66 = sbr.rel (0) target = $region25
    $region24: #{tpu_custom_call.1} parent=1 // pred_region
      _
    $region25: #{tpu_custom_call.1} parent=1 // pred_fallthru
      _
    // Predicated region
    $region26: #{tpu_custom_call.1} parent=1 // pred_check
      _
    $region27: #{tpu_custom_call.1} parent=1 // pred_check_branch
      %68 = sbr.rel (0) target = $region29
    $region28: #{tpu_custom_call.1} parent=1 // pred_region
      _
    $region29: #{tpu_custom_call.1} parent=1 // pred_fallthru
      _
    // Predicated region
    $region30: #{tpu_custom_call.1} parent=1 // pred_check
      _
    $region31: #{tpu_custom_call.1} parent=1 // pred_check_branch
      %70 = sbr.rel (0) target = $region33
    $region32: #{tpu_custom_call.1} parent=1 // pred_region
      %71 = dma.done [#allocation3], 384
    $region33: #{tpu_custom_call.1} parent=1 // pred_fallthru
      _
    // Predicated region
    $region34: #{tpu_custom_call.1} parent=1 // pred_check
      _
    $region35: #{tpu_custom_call.1} parent=1 // pred_check_branch
      %73 = sbr.rel (0) target = $region37
    $region36: #{tpu_custom_call.1} parent=1 // pred_region
      %74 = dma.done [#allocation6], 256
    $region37: #{tpu_custom_call.1} parent=1 // pred_fallthru
      _
    // Predicated region
    $region38: #{tpu_custom_call.1} parent=1 // pred_check
      _
    $region39: #{tpu_custom_call.1} parent=1 // pred_check_branch
      %76 = sbr.rel (0) target = $region41
    $region40: #{tpu_custom_call.1} parent=1 // pred_region
      %77 = dma.done [#allocation6], 12672
    $region41: #{tpu_custom_call.1} parent=1 // pred_fallthru
      _
    // Predicated region
    $region42: #{tpu_custom_call.1} parent=1 // pred_check
      _
    $region43: #{tpu_custom_call.1} parent=1 // pred_check_branch
      %79 = sbr.rel (0) target = $region45
    $region44: #{tpu_custom_call.1} parent=1 // pred_region
      %80 = dma.done [#allocation9], 2176
    $region45: #{tpu_custom_call.1} parent=1 // pred_fallthru
      _
    %v81 = vld [vmem:[#allocation2] sm:$0xff]
    %v82 = vld [vmem:[#allocation2 + $0x8] sm:$0xff]
    %v83 = vld [vmem:[#allocation2 + $0x10] sm:$0xff]
    %v84 = vld [vmem:[#allocation7] sm:$0xff]
    %v85 = vld [vmem:[#allocation7 + $0x8] sm:$0xff]
    %v86 = vld [vmem:[#allocation7 + $0x10] sm:$0xff]
    %v87 = vld [vmem:[#allocation7 + $0x18] sm:$0xff]
    %v88 = vld [vmem:[#allocation7 + $0x20] sm:$0xff]
    %v89 = vld [vmem:[#allocation7 + $0x28] sm:$0xff]
    %v90 = vld [vmem:[#allocation7 + $0x30] sm:$0xff]
    %v91 = vld [vmem:[#allocation7 + $0x38] sm:$0xff]
    %v92 = vld [vmem:[#allocation7 + $0x40] sm:$0xff]
    %v93 = vld [vmem:[#allocation7 + $0x48] sm:$0xff]
    %v94 = vld [vmem:[#allocation7 + $0x50] sm:$0xff]
    %v95 = vld [vmem:[#allocation7 + $0x58] sm:$0xff]
    %v96 = vld [vmem:[#allocation7 + $0x60] sm:$0xff]
    %v97 = vld [vmem:[#allocation7 + $0x68] sm:$0xff]
    %v98 = vld [vmem:[#allocation7 + $0x70] sm:$0xff]
    %v99 = vld [vmem:[#allocation7 + $0x78] sm:$0xff]
    %v100 = vld [vmem:[#allocation7 + $0x80] sm:$0xff]
    %v101 = vld [vmem:[#allocation7 + $0x88] sm:$0xff]
    %v102 = vld [vmem:[#allocation7 + $0x90] sm:$0xff]
    %v103 = vld [vmem:[#allocation7 + $0x98] sm:$0xff]
    %v104 = vld [vmem:[#allocation7 + $0xa0] sm:$0xff]
    %v105 = vld [vmem:[#allocation7 + $0xa8] sm:$0xff]
    %v106 = vld [vmem:[#allocation7 + $0xb0] sm:$0xff]
    %v107 = vld [vmem:[#allocation7 + $0xb8] sm:$0xff]
    %v108 = vld [vmem:[#allocation7 + $0xc0] sm:$0xff]
    %v109 = vld [vmem:[#allocation7 + $0xc8] sm:$0xff]
    %v110 = vld [vmem:[#allocation7 + $0xd0] sm:$0xff]
    %v111 = vld [vmem:[#allocation7 + $0xd8] sm:$0xff]
    %v112 = vld [vmem:[#allocation7 + $0xe0] sm:$0xff]
    %v113 = vld [vmem:[#allocation7 + $0xe8] sm:$0xff]
    %v114 = vld [vmem:[#allocation7 + $0xf0] sm:$0xff]
    %v115 = vld [vmem:[#allocation7 + $0xf8] sm:$0xff]
    %v116 = vld [vmem:[#allocation7 + $0x100] sm:$0xff]
    %v117 = vld [vmem:[#allocation7 + $0x108] sm:$0xff]
    %v118 = vld [vmem:[#allocation7 + $0x110] sm:$0xff]
    %v119 = vld [vmem:[#allocation7 + $0x118] sm:$0xff]
    %v120 = vld [vmem:[#allocation7 + $0x120] sm:$0xff]
    %v121 = vld [vmem:[#allocation7 + $0x128] sm:$0xff]
    %v122 = vld [vmem:[#allocation7 + $0x130] sm:$0xff]
    %v123 = vld [vmem:[#allocation7 + $0x138] sm:$0xff]
    %v124 = vld [vmem:[#allocation7 + $0x140] sm:$0xff]
    %v125 = vld [vmem:[#allocation7 + $0x148] sm:$0xff]
    %v126 = vld [vmem:[#allocation7 + $0x150] sm:$0xff]
    %v127 = vld [vmem:[#allocation7 + $0x158] sm:$0xff]
    %v128 = vld [vmem:[#allocation7 + $0x160] sm:$0xff]
    %v129 = vld [vmem:[#allocation7 + $0x168] sm:$0xff]
    %v130 = vld [vmem:[#allocation7 + $0x170] sm:$0xff]
    %v131 = vld [vmem:[#allocation7 + $0x178] sm:$0xff]
    %v132 = vld [vmem:[#allocation7 + $0x180] sm:$0xff]
    %v133 = vld [vmem:[#allocation7 + $0x188] sm:$0xff]
    %v134 = vld [vmem:[#allocation7 + $0x190] sm:$0xff]
    %v135 = vld [vmem:[#allocation7 + $0x198] sm:$0xff]
    %v136 = vld [vmem:[#allocation7 + $0x1a0] sm:$0xff]
    %v137 = vld [vmem:[#allocation7 + $0x1a8] sm:$0xff]
    %v138 = vld [vmem:[#allocation7 + $0x1b0] sm:$0xff]
    %v139 = vld [vmem:[#allocation7 + $0x1b8] sm:$0xff]
    %v140 = vld [vmem:[#allocation7 + $0x1c0] sm:$0xff]
    %v141 = vld [vmem:[#allocation7 + $0x1c8] sm:$0xff]
    %v142 = vld [vmem:[#allocation7 + $0x1d0] sm:$0xff]
    %v143 = vld [vmem:[#allocation7 + $0x1d8] sm:$0xff]
    %v144 = vld [vmem:[#allocation7 + $0x1e0] sm:$0xff]
    %v145 = vld [vmem:[#allocation7 + $0x1e8] sm:$0xff]
    %v146 = vld [vmem:[#allocation7 + $0x1f0] sm:$0xff]
    %v147 = vld [vmem:[#allocation7 + $0x1f8] sm:$0xff]
    %v148 = vld [vmem:[#allocation7 + $0x200] sm:$0xff]
    %v149 = vld [vmem:[#allocation7 + $0x208] sm:$0xff]
    %v150 = vld [vmem:[#allocation7 + $0x210] sm:$0xff]
    %v151 = vld [vmem:[#allocation7 + $0x218] sm:$0xff]
    %v152 = vld [vmem:[#allocation7 + $0x220] sm:$0xff]
    %v153 = vld [vmem:[#allocation7 + $0x228] sm:$0xff]
    %v154 = vld [vmem:[#allocation7 + $0x230] sm:$0xff]
    %v155 = vld [vmem:[#allocation7 + $0x238] sm:$0xff]
    %v156 = vld [vmem:[#allocation7 + $0x240] sm:$0xff]
    %v157 = vld [vmem:[#allocation7 + $0x248] sm:$0xff]
    %v158 = vld [vmem:[#allocation7 + $0x250] sm:$0xff]
    %v159 = vld [vmem:[#allocation7 + $0x258] sm:$0xff]
    %v160 = vld [vmem:[#allocation7 + $0x260] sm:$0xff]
    %v161 = vld [vmem:[#allocation7 + $0x268] sm:$0xff]
    %v162 = vld [vmem:[#allocation7 + $0x270] sm:$0xff]
    %v163 = vld [vmem:[#allocation7 + $0x278] sm:$0xff]
    %v164 = vld [vmem:[#allocation7 + $0x280] sm:$0xff]
    %v165 = vld [vmem:[#allocation7 + $0x288] sm:$0xff]
    %v166 = vld [vmem:[#allocation7 + $0x290] sm:$0xff]
    %v167 = vld [vmem:[#allocation7 + $0x298] sm:$0xff]
    %v168 = vld [vmem:[#allocation7 + $0x2a0] sm:$0xff]
    %v169 = vld [vmem:[#allocation7 + $0x2a8] sm:$0xff]
    %v170 = vld [vmem:[#allocation7 + $0x2b0] sm:$0xff]
    %v171 = vld [vmem:[#allocation7 + $0x2b8] sm:$0xff]
    %v172 = vld [vmem:[#allocation7 + $0x2c0] sm:$0xff]
    %v173 = vld [vmem:[#allocation7 + $0x2c8] sm:$0xff]
    %v174 = vld [vmem:[#allocation7 + $0x2d0] sm:$0xff]
    %v175 = vld [vmem:[#allocation7 + $0x2d8] sm:$0xff]
    %v176 = vld [vmem:[#allocation7 + $0x2e0] sm:$0xff]
    %v177 = vld [vmem:[#allocation7 + $0x2e8] sm:$0xff]
    %v178 = vld [vmem:[#allocation7 + $0x2f0] sm:$0xff]
    %v179 = vld [vmem:[#allocation7 + $0x2f8] sm:$0xff]
    %v180 = vld [vmem:[#allocation7 + $0x300] sm:$0xff]
    %v181 = vld [vmem:[#allocation7 + $0x308] sm:$0xff]
    %v182 = vld [vmem:[#allocation7 + $0x310] sm:$0xff]
    %v183 = vld [vmem:[%s4] sm:$0x7]
    %v185 = vlaneseq
    %v186 = vshrl.u32 %v185, 7
    %v187 = vsub.s32 0, %v186
    %v188 = vrot.slane %v183, %v187
    %v189 = vlaneseq
    %v190 = vshrl.u32 %v189, 7
    %v191 = vsub.s32 1, %v190
    %v192 = vrot.slane %v183, %v191
    %v193 = vlaneseq
    %v194 = vshrl.u32 %v193, 7
    %v195 = vsub.s32 2, %v194
    %v196 = vrot.slane %v183, %v195
    %vm200 = vcmask 64512
    %v202 = vsel %vm200, %v83, 0
    %204 = vmatprep.subr.mxu0 %v85
    %205 = vmatpush1.msra.mxu0 %v84
    %206 = vmatprep.subr.mxu0 %v88
    %207 = vmatpush1.msra.mxu0 %v87
    %208 = vmatprep.subr.mxu0 %v91
    %209 = vmatpush1.msra.mxu0 %v90
    %210 = vmatprep.subr.mxu0 %v94
    %211 = vmatpush1.msra.mxu0 %v93
    %212 = vmatprep.subr.mxu0 %v97
    %213 = vmatpush1.msra.mxu0 %v96
    %214 = vmatprep.subr.mxu0 %v100
    %215 = vmatpush1.msra.mxu0 %v99
    %216 = vmatprep.subr.mxu0 %v103
    %217 = vmatpush1.msra.mxu0 %v102
    %218 = vmatprep.subr.mxu0 %v106
    %219 = vmatpush1.msra.mxu0 %v105
    %220 = vmatprep.subr.mxu0 %v109
    %221 = vmatpush1.msra.mxu0 %v108
    %222 = vmatprep.subr.mxu0 %v112
    %223 = vmatpush1.msra.mxu0 %v111
    %224 = vmatprep.subr.mxu0 %v115
    %225 = vmatpush1.msra.mxu0 %v114
    %226 = vmatprep.subr.mxu0 %v118
    %227 = vmatpush1.msra.mxu0 %v117
    %228 = vmatprep.subr.mxu0 %v121
    %229 = vmatpush1.msra.mxu0 %v120
    %230 = vmatprep.subr.mxu0 %v124
    %231 = vmatpush1.msra.mxu0 %v123
    %232 = vmatprep.subr.mxu0 %v127
    %233 = vmatpush1.msra.mxu0 %v126
    %234 = vmatprep.subr.mxu0 %v130
    %235 = vmatpush1.msra.mxu0 %v129
    %236 = vmatprep.subr.mxu0 %v133
    %237 = vmatpush1.msra.mxu0 %v132
    %238 = vmatprep.subr.mxu0 %v136
    %239 = vmatpush1.msra.mxu0 %v135
    %240 = vmatprep.subr.mxu0 %v139
    %241 = vmatpush1.msra.mxu0 %v138
    %242 = vmatprep.subr.mxu0 %v142
    %243 = vmatpush1.msra.mxu0 %v141
    %244 = vmatprep.subr.mxu0 %v145
    %245 = vmatpush1.msra.mxu0 %v144
    %246 = vmatprep.subr.mxu0 %v148
    %247 = vmatpush1.msra.mxu0 %v147
    %248 = vmatprep.subr.mxu0 %v151
    %249 = vmatpush1.msra.mxu0 %v150
    %250 = vmatprep.subr.mxu0 %v154
    %251 = vmatpush1.msra.mxu0 %v153
    %252 = vmatprep.subr.mxu0 %v157
    %253 = vmatpush1.msra.mxu0 %v156
    %254 = vmatprep.subr.mxu0 %v160
    %255 = vmatpush1.msra.mxu0 %v159
    %256 = vmatprep.subr.mxu0 %v163
    %257 = vmatpush1.msra.mxu0 %v162
    %258 = vmatprep.subr.mxu0 %v166
    %259 = vmatpush1.msra.mxu0 %v165
    %260 = vmatprep.subr.mxu0 %v169
    %261 = vmatpush1.msra.mxu0 %v168
    %262 = vmatprep.subr.mxu0 %v172
    %263 = vmatpush1.msra.mxu0 %v171
    %264 = vmatprep.subr.mxu0 %v175
    %265 = vmatpush1.msra.mxu0 %v174
    %266 = vmatprep.subr.mxu0 %v178
    %267 = vmatpush1.msra.mxu0 %v177
    %268 = vmatprep.mubr.f32.mxu0 %v82
    %269 = vmatmul.mubr.f32.gmra.mrb[0].mxu0 %v81
    %v270 = vpop.f32.mrb[0].mxu0
    %v271 = vadd.f32 %v188, %v270
    %v272 = vpop.f32.mrb[0].mxu0
    %v273 = vadd.f32 %v192, %v272
    %274 = vdwg.mxu0
    %275 = vmatprep.subr.mxu0 %v181
    %276 = vmatpush1.msra.mxu0 %v180
    %277 = vmatprep.subr.mxu0 0.0
    %278 = vmatpush1.msra.mxu0 0.0
    %279 = vmatprep.subr.mxu0 0.0
    %280 = vmatpush1.msra.mxu0 0.0
    %281 = vmatprep.subr.mxu0 0.0
    %282 = vmatpush1.msra.mxu0 0.0
    %283 = vmatprep.subr.mxu0 0.0
    %284 = vmatpush1.msra.mxu0 0.0
    %285 = vmatprep.subr.mxu0 0.0
    %286 = vmatpush1.msra.mxu0 0.0
    %287 = vmatprep.subr.mxu0 0.0
    %288 = vmatpush1.msra.mxu0 0.0
    %289 = vmatprep.subr.mxu0 0.0
    %290 = vmatpush1.msra.mxu0 0.0
    %291 = vmatprep.subr.mxu0 0.0
    %292 = vmatpush1.msra.mxu0 0.0
    %293 = vmatprep.subr.mxu0 0.0
    %294 = vmatpush1.msra.mxu0 0.0
    %295 = vmatprep.subr.mxu0 0.0
    %296 = vmatpush1.msra.mxu0 0.0
    %297 = vmatprep.subr.mxu0 0.0
    %298 = vmatpush1.msra.mxu0 0.0
    %299 = vmatprep.subr.mxu0 0.0
    %300 = vmatpush1.msra.mxu0 0.0
    %301 = vmatprep.subr.mxu0 0.0
    %302 = vmatpush1.msra.mxu0 0.0
    %303 = vmatprep.subr.mxu0 0.0
    %304 = vmatpush1.msra.mxu0 0.0
    %305 = vmatprep.subr.mxu0 0.0
    %306 = vmatpush1.msra.mxu0 0.0
    %307 = vmatprep.subr.mxu0 0.0
    %308 = vmatpush1.msra.mxu0 0.0
    %309 = vmatprep.subr.mxu0 0.0
    %310 = vmatpush1.msra.mxu0 0.0
    %311 = vmatprep.subr.mxu0 0.0
    %312 = vmatpush1.msra.mxu0 0.0
    %313 = vmatprep.subr.mxu0 0.0
    %314 = vmatpush1.msra.mxu0 0.0
    %315 = vmatprep.subr.mxu0 0.0
    %316 = vmatpush1.msra.mxu0 0.0
    %317 = vmatprep.subr.mxu0 0.0
    %318 = vmatpush1.msra.mxu0 0.0
    %319 = vmatprep.subr.mxu0 0.0
    %320 = vmatpush1.msra.mxu0 0.0
    %321 = vmatprep.subr.mxu0 0.0
    %322 = vmatpush1.msra.mxu0 0.0
    %323 = vmatprep.subr.mxu0 0.0
    %324 = vmatpush1.msra.mxu0 0.0
    %325 = vmatprep.subr.mxu0 0.0
    %326 = vmatpush1.msra.mxu0 0.0
    %327 = vmatprep.subr.mxu0 0.0
    %328 = vmatpush1.msra.mxu0 0.0
    %329 = vmatprep.subr.mxu0 0.0
    %330 = vmatpush1.msra.mxu0 0.0
    %331 = vmatprep.subr.mxu0 0.0
    %332 = vmatpush1.msra.mxu0 0.0
    %333 = vmatprep.subr.mxu0 0.0
    %334 = vmatpush1.msra.mxu0 0.0
    %335 = vmatprep.subr.mxu0 0.0
    %336 = vmatpush1.msra.mxu0 0.0
    %337 = vmatprep.subr.mxu0 0.0
    %338 = vmatpush1.msra.mxu0 0.0
    %339 = vmatprep.mubr.f32.mxu0 0.0
    %340 = vmatmul.mubr.f32.gmra.mrb[0].mxu0 %v202
    %v341 = vpop.f32.mrb[0].mxu0
    %v342 = vadd.f32 %v271, %v341
    %v343 = vpop.f32.mrb[0].mxu0
    %v344 = vadd.f32 %v273, %v343
    %345 = vdwg.mxu0
    %346 = vmatprep.subr.mxu0 0.0
    %347 = vmatpush1.msra.mxu0 %v86
    %348 = vmatprep.subr.mxu0 0.0
    %349 = vmatpush1.msra.mxu0 %v89
    %350 = vmatprep.subr.mxu0 0.0
    %351 = vmatpush1.msra.mxu0 %v92
    %352 = vmatprep.subr.mxu0 0.0
    %353 = vmatpush1.msra.mxu0 %v95
    %354 = vmatprep.subr.mxu0 0.0
    %355 = vmatpush1.msra.mxu0 %v98
    %356 = vmatprep.subr.mxu0 0.0
    %357 = vmatpush1.msra.mxu0 %v101
    %358 = vmatprep.subr.mxu0 0.0
    %359 = vmatpush1.msra.mxu0 %v104
    %360 = vmatprep.subr.mxu0 0.0
    %361 = vmatpush1.msra.mxu0 %v107
    %362 = vmatprep.subr.mxu0 0.0
    %363 = vmatpush1.msra.mxu0 %v110
    %364 = vmatprep.subr.mxu0 0.0
    %365 = vmatpush1.msra.mxu0 %v113
    %366 = vmatprep.subr.mxu0 0.0
    %367 = vmatpush1.msra.mxu0 %v116
    %368 = vmatprep.subr.mxu0 0.0
    %369 = vmatpush1.msra.mxu0 %v119
    %370 = vmatprep.subr.mxu0 0.0
    %371 = vmatpush1.msra.mxu0 %v122
    %372 = vmatprep.subr.mxu0 0.0
    %373 = vmatpush1.msra.mxu0 %v125
    %374 = vmatprep.subr.mxu0 0.0
    %375 = vmatpush1.msra.mxu0 %v128
    %376 = vmatprep.subr.mxu0 0.0
    %377 = vmatpush1.msra.mxu0 %v131
    %378 = vmatprep.subr.mxu0 0.0
    %379 = vmatpush1.msra.mxu0 %v134
    %380 = vmatprep.subr.mxu0 0.0
    %381 = vmatpush1.msra.mxu0 %v137
    %382 = vmatprep.subr.mxu0 0.0
    %383 = vmatpush1.msra.mxu0 %v140
    %384 = vmatprep.subr.mxu0 0.0
    %385 = vmatpush1.msra.mxu0 %v143
    %386 = vmatprep.subr.mxu0 0.0
    %387 = vmatpush1.msra.mxu0 %v146
    %388 = vmatprep.subr.mxu0 0.0
    %389 = vmatpush1.msra.mxu0 %v149
    %390 = vmatprep.subr.mxu0 0.0
    %391 = vmatpush1.msra.mxu0 %v152
    %392 = vmatprep.subr.mxu0 0.0
    %393 = vmatpush1.msra.mxu0 %v155
    %394 = vmatprep.subr.mxu0 0.0
    %395 = vmatpush1.msra.mxu0 %v158
    %396 = vmatprep.subr.mxu0 0.0
    %397 = vmatpush1.msra.mxu0 %v161
    %398 = vmatprep.subr.mxu0 0.0
    %399 = vmatpush1.msra.mxu0 %v164
    %400 = vmatprep.subr.mxu0 0.0
    %401 = vmatpush1.msra.mxu0 %v167
    %402 = vmatprep.subr.mxu0 0.0
    %403 = vmatpush1.msra.mxu0 %v170
    %404 = vmatprep.subr.mxu0 0.0
    %405 = vmatpush1.msra.mxu0 %v173
    %406 = vmatprep.subr.mxu0 0.0
    %407 = vmatpush1.msra.mxu0 %v176
    %408 = vmatprep.subr.mxu0 0.0
    %409 = vmatpush1.msra.mxu0 %v179
    %410 = vmatprep.mubr.f32.mxu0 %v82
    %411 = vmatmul.mubr.f32.gmra.mrb[0].mxu0 %v81
    %v412 = vpop.f32.mrb[0].mxu0
    %v413 = vadd.f32 %v196, %v412
    %v414 = vpop.f32.mrb[0].mxu0
    %415 = vdwg.mxu0
    %416 = vmatprep.subr.mxu0 0.0
    %417 = vmatpush1.msra.mxu0 %v182
    %418 = vmatprep.subr.mxu0 0.0
    %419 = vmatpush1.msra.mxu0 0.0
    %420 = vmatprep.subr.mxu0 0.0
    %421 = vmatpush1.msra.mxu0 0.0
    %422 = vmatprep.subr.mxu0 0.0
    %423 = vmatpush1.msra.mxu0 0.0
    %424 = vmatprep.subr.mxu0 0.0
    %425 = vmatpush1.msra.mxu0 0.0
    %426 = vmatprep.subr.mxu0 0.0
    %427 = vmatpush1.msra.mxu0 0.0
    %428 = vmatprep.subr.mxu0 0.0
    %429 = vmatpush1.msra.mxu0 0.0
    %430 = vmatprep.subr.mxu0 0.0
    %431 = vmatpush1.msra.mxu0 0.0
    %432 = vmatprep.subr.mxu0 0.0
    %433 = vmatpush1.msra.mxu0 0.0
    %434 = vmatprep.subr.mxu0 0.0
    %435 = vmatpush1.msra.mxu0 0.0
    %436 = vmatprep.subr.mxu0 0.0
    %437 = vmatpush1.msra.mxu0 0.0
    %438 = vmatprep.subr.mxu0 0.0
    %439 = vmatpush1.msra.mxu0 0.0
    %440 = vmatprep.subr.mxu0 0.0
    %441 = vmatpush1.msra.mxu0 0.0
    %442 = vmatprep.subr.mxu0 0.0
    %443 = vmatpush1.msra.mxu0 0.0
    %444 = vmatprep.subr.mxu0 0.0
    %445 = vmatpush1.msra.mxu0 0.0
    %446 = vmatprep.subr.mxu0 0.0
    %447 = vmatpush1.msra.mxu0 0.0
    %448 = vmatprep.subr.mxu0 0.0
    %449 = vmatpush1.msra.mxu0 0.0
    %450 = vmatprep.subr.mxu0 0.0
    %451 = vmatpush1.msra.mxu0 0.0
    %452 = vmatprep.subr.mxu0 0.0
    %453 = vmatpush1.msra.mxu0 0.0
    %454 = vmatprep.subr.mxu0 0.0
    %455 = vmatpush1.msra.mxu0 0.0
    %456 = vmatprep.subr.mxu0 0.0
    %457 = vmatpush1.msra.mxu0 0.0
    %458 = vmatprep.subr.mxu0 0.0
    %459 = vmatpush1.msra.mxu0 0.0
    %460 = vmatprep.subr.mxu0 0.0
    %461 = vmatpush1.msra.mxu0 0.0
    %462 = vmatprep.subr.mxu0 0.0
    %463 = vmatpush1.msra.mxu0 0.0
    %464 = vmatprep.subr.mxu0 0.0
    %465 = vmatpush1.msra.mxu0 0.0
    %466 = vmatprep.subr.mxu0 0.0
    %467 = vmatpush1.msra.mxu0 0.0
    %468 = vmatprep.subr.mxu0 0.0
    %469 = vmatpush1.msra.mxu0 0.0
    %470 = vmatprep.subr.mxu0 0.0
    %471 = vmatpush1.msra.mxu0 0.0
    %472 = vmatprep.subr.mxu0 0.0
    %473 = vmatpush1.msra.mxu0 0.0
    %474 = vmatprep.subr.mxu0 0.0
    %475 = vmatpush1.msra.mxu0 0.0
    %476 = vmatprep.subr.mxu0 0.0
    %477 = vmatpush1.msra.mxu0 0.0
    %478 = vmatprep.subr.mxu0 0.0
    %479 = vmatpush1.msra.mxu0 0.0
    %480 = vmatprep.mubr.f32.mxu0 0.0
    %481 = vmatmul.mubr.f32.gmra.mrb[0].mxu0 %v202
    %v482 = vpop.f32.mrb[0].mxu0
    %v483 = vadd.f32 %v413, %v482
    %v484 = vpop.f32.mrb[0].mxu0
    %485 = vdwg.mxu0
    %v486 = vld [vmem:[#allocation5] sm:$0xff]
    %v487 = vld [vmem:[#allocation5 + $0x8] sm:$0xff]
    %v488 = vld [vmem:[#allocation8] sm:$0xff]
    %v489 = vld [vmem:[#allocation8 + $0x8] sm:$0xff]
    %v490 = vld [vmem:[#allocation8 + $0x10] sm:$0xff]
    %v491 = vld [vmem:[#allocation8 + $0x18] sm:$0xff]
    %v492 = vld [vmem:[#allocation8 + $0x20] sm:$0xff]
    %v493 = vld [vmem:[#allocation8 + $0x28] sm:$0xff]
    %v494 = vld [vmem:[#allocation8 + $0x30] sm:$0xff]
    %v495 = vld [vmem:[#allocation8 + $0x38] sm:$0xff]
    %v496 = vld [vmem:[#allocation8 + $0x40] sm:$0xff]
    %v497 = vld [vmem:[#allocation8 + $0x48] sm:$0xff]
    %v498 = vld [vmem:[#allocation8 + $0x50] sm:$0xff]
    %v499 = vld [vmem:[#allocation8 + $0x58] sm:$0xff]
    %v500 = vld [vmem:[#allocation8 + $0x60] sm:$0xff]
    %v501 = vld [vmem:[#allocation8 + $0x68] sm:$0xff]
    %v502 = vld [vmem:[#allocation8 + $0x70] sm:$0xff]
    %v503 = vld [vmem:[#allocation8 + $0x78] sm:$0xff]
    %v504 = vld [vmem:[#allocation8 + $0x80] sm:$0xff]
    %v505 = vld [vmem:[%s5] sm:$0x1]
    %v507 = vlaneseq
    %v508 = vshrl.u32 %v507, 7
    %v509 = vsub.s32 0, %v508
    %v510 = vrot.slane %v505, %v509
    %v513 = vsel %vm200, %v487, 0
    %515 = vmatprep.subr.mxu0 0.0
    %516 = vmatpush1.msra.mxu0 %v488
    %517 = vmatprep.subr.mxu0 0.0
    %518 = vmatpush1.msra.mxu0 %v489
    %519 = vmatprep.subr.mxu0 0.0
    %520 = vmatpush1.msra.mxu0 %v490
    %521 = vmatprep.subr.mxu0 0.0
    %522 = vmatpush1.msra.mxu0 %v491
    %523 = vmatprep.subr.mxu0 0.0
    %524 = vmatpush1.msra.mxu0 %v492
    %525 = vmatprep.subr.mxu0 0.0
    %526 = vmatpush1.msra.mxu0 %v493
    %527 = vmatprep.subr.mxu0 0.0
    %528 = vmatpush1.msra.mxu0 %v494
    %529 = vmatprep.subr.mxu0 0.0
    %530 = vmatpush1.msra.mxu0 %v495
    %531 = vmatprep.subr.mxu0 0.0
    %532 = vmatpush1.msra.mxu0 %v496
    %533 = vmatprep.subr.mxu0 0.0
    %534 = vmatpush1.msra.mxu0 %v497
    %535 = vmatprep.subr.mxu0 0.0
    %536 = vmatpush1.msra.mxu0 %v498
    %537 = vmatprep.subr.mxu0 0.0
    %538 = vmatpush1.msra.mxu0 %v499
    %539 = vmatprep.subr.mxu0 0.0
    %540 = vmatpush1.msra.mxu0 %v500
    %541 = vmatprep.subr.mxu0 0.0
    %542 = vmatpush1.msra.mxu0 %v501
    %543 = vmatprep.subr.mxu0 0.0
    %544 = vmatpush1.msra.mxu0 %v502
    %545 = vmatprep.subr.mxu0 0.0
    %546 = vmatpush1.msra.mxu0 %v503
    %547 = vmatprep.subr.mxu0 0.0
    %548 = vmatpush1.msra.mxu0 %v504
    %549 = vmatprep.subr.mxu0 0.0
    %550 = vmatpush1.msra.mxu0 0.0
    %551 = vmatprep.subr.mxu0 0.0
    %552 = vmatpush1.msra.mxu0 0.0
    %553 = vmatprep.subr.mxu0 0.0
    %554 = vmatpush1.msra.mxu0 0.0
    %555 = vmatprep.subr.mxu0 0.0
    %556 = vmatpush1.msra.mxu0 0.0
    %557 = vmatprep.subr.mxu0 0.0
    %558 = vmatpush1.msra.mxu0 0.0
    %559 = vmatprep.subr.mxu0 0.0
    %560 = vmatpush1.msra.mxu0 0.0
    %561 = vmatprep.subr.mxu0 0.0
    %562 = vmatpush1.msra.mxu0 0.0
    %563 = vmatprep.subr.mxu0 0.0
    %564 = vmatpush1.msra.mxu0 0.0
    %565 = vmatprep.subr.mxu0 0.0
    %566 = vmatpush1.msra.mxu0 0.0
    %567 = vmatprep.subr.mxu0 0.0
    %568 = vmatpush1.msra.mxu0 0.0
    %569 = vmatprep.subr.mxu0 0.0
    %570 = vmatpush1.msra.mxu0 0.0
    %571 = vmatprep.subr.mxu0 0.0
    %572 = vmatpush1.msra.mxu0 0.0
    %573 = vmatprep.subr.mxu0 0.0
    %574 = vmatpush1.msra.mxu0 0.0
    %575 = vmatprep.subr.mxu0 0.0
    %576 = vmatpush1.msra.mxu0 0.0
    %577 = vmatprep.subr.mxu0 0.0
    %578 = vmatpush1.msra.mxu0 0.0
    %579 = vmatprep.mubr.f32.mxu0 %v513
    %580 = vmatmul.mubr.f32.gmra.mrb[0].mxu0 %v486
    %v581 = vpop.f32.mrb[0].mxu0
    %v582 = vadd.f32 %v510, %v581
    %v583 = vpop.f32.mrb[0].mxu0
    %584 = vdwg.mxu0
    %v585 = vxor.u32 %v342, 2147483648
    %v586 = vmul.f32 %v585, 1.442695
    %v587 = vpow.pop %v586
    %v588 = vadd.f32 %v587, 1.0
    %v589 = vrcp.pop %v588
    %v590 = vmul.f32 1.0, %v589
    %v591 = vxor.u32 %v344, 2147483648
    %v592 = vmul.f32 %v591, 1.442695
    %v593 = vpow.pop %v592
    %v594 = vadd.f32 %v593, 1.0
    %v595 = vrcp.pop %v594
    %v596 = vmul.f32 1.0, %v595
    %v597 = vxor.u32 %v483, 2147483648
    %v598 = vmul.f32 %v597, 1.442695
    %v599 = vpow.pop %v598
    %v600 = vadd.f32 %v599, 1.0
    %v601 = vrcp.pop %v600
    %v602 = vmul.f32 1.0, %v601
    %v603 = vtanh.pop %v582
    %v604 = vld [vmem:[%s6] sm:$0xff]
    %v605 = vmul.f32 %v590, %v604
    %v606 = vmul.f32 %v596, %v603
    %v607 = vsub.f32 %v605, %v606
    %v608 = vmul.f32 %v602, %v603
    %609 = vst [vmem:[#allocation11] sm:$0xff] %v607
    %610 = vst [vmem:[#allocation10] sm:$0xff] %v608
    // Predicated region
    $region46: #{tpu_custom_call.1} parent=1 // pred_check
      _
    $region47: #{tpu_custom_call.1} parent=1 // pred_check_branch
      %612 = sbr.rel (0) target = $region49
    $region48: #{tpu_custom_call.1} parent=1 // pred_region
      %s614 = ssub.s32 128, 128
      %615 = vsyncadd [#allocation4], %s614
      %s617 = sshll.u32 [#allocation10], 4
      %s618 = int_to_ptr.vmem [resolvable:$true] %s617
      %620 = dma.vmem_to_hbm [thread:$0]  %s618, 128, %s7, [#allocation4]
    $region49: #{tpu_custom_call.1} parent=1 // pred_fallthru
      _
    // Predicated region
    $region50: #{tpu_custom_call.1} parent=1 // pred_check
      _
    $region51: #{tpu_custom_call.1} parent=1 // pred_check_branch
      %622 = sbr.rel (0) target = $region53
    $region52: #{tpu_custom_call.1} parent=1 // pred_region
      %s624 = ssub.s32 128, 128
      %625 = vsyncadd [#allocation12], %s624
      %s627 = sshll.u32 [#allocation11], 4
      %s628 = int_to_ptr.vmem [resolvable:$true] %s627
      %630 = dma.vmem_to_hbm [thread:$0]  %s628, 128, %s8, [#allocation12]
    $region53: #{tpu_custom_call.1} parent=1 // pred_fallthru
      _
    // Predicated region
    $region54: #{tpu_custom_call.1} parent=1 // pred_check
      _
    $region55: #{tpu_custom_call.1} parent=1 // pred_check_branch
      %632 = sbr.rel (0) target = $region57
    $region56: #{tpu_custom_call.1} parent=1 // pred_region
      %633 = dma.done [#allocation4], 128
    $region57: #{tpu_custom_call.1} parent=1 // pred_fallthru
      _
    // Predicated region
    $region58: #{tpu_custom_call.1} parent=1 // pred_check
      _
    $region59: #{tpu_custom_call.1} parent=1 // pred_check_branch
      %635 = sbr.rel (0) target = $region61
    $region60: #{tpu_custom_call.1} parent=1 // pred_region
      %636 = dma.done [#allocation12], 128
    $region61: #{tpu_custom_call.1} parent=1 // pred_fallthru
      _
    %637 = vsyncpa [#allocation3], 1
    %638 = vsyncpa [#allocation6], 1
    %639 = vsyncpa [#allocation9], 1
    %640 = vsyncpa [#allocation4], 1
    %641 = vsyncpa [#allocation12], 1

</llo_original>
